<compile_context>
chip_gen: v7x
topology: tpu7x:2x2x1
jax: 0.10.0
libtpu: 0.0.40
codegen_flags: <defaults>
</compile_context>

<pallas_src>
import functools

import jax
import jax.numpy as jnp
from jax import lax
from jax.experimental import pallas as pl
from jax.experimental.pallas import tpu as pltpu


def _round_up(x, m):
    return ((x + m - 1) // m) * m


_VMEM_LIMIT_BYTES = 32 * 1024 * 1024   # safe on v5e/v6e/v7x; working sets below are a few MiB


# -----------------------------------------------------------------------------
# SoftDotAttention: (batch, word-block) Pallas kernel, context resident per batch
# -----------------------------------------------------------------------------
def _make_soft_dot_kernel(output_tilde, output_prob):
    def kernel(h_ref, ctx_ref, mask_ref, win_t_ref, wout_wc_ref, wout_h_ref,
               out0_ref, attn_ref):
        h = h_ref[0]                                   # (TL, Q)  f32
        ctx = ctx_ref[0]                               # (S_pad, C)  ctx dtype (f32 or bf16)
        mask = mask_ref[0]                             # (1, S_pad) int32

        # target = linear_in(h): (TL, Q) @ (Q, C) on the MXU.
        target = jnp.dot(h, win_t_ref[...], preferred_element_type=jnp.float32)

        # scores[l, s] = <target[l, :], ctx[s, :]>  --  NT matmul on the MXU
        # (bf16 inputs with f32 accumulation when ctx is bf16; no context transpose in VMEM).
        scores = lax.dot_general(
            target.astype(ctx.dtype), ctx,
            dimension_numbers=(((1,), (1,)), ((), ())),
            preferred_element_type=jnp.float32)        # (TL, S_pad)

        masked = jnp.where(mask != 0, -jnp.inf, scores)

        # Softmax over the (padded, lane-dense) seq dim. NOTE: a fully user-masked row yields
        # NaN, matching torch.softmax over an all -inf row.
        m = jnp.max(masked, axis=-1, keepdims=True)
        unnorm = jnp.exp(masked - m)
        denom = jnp.sum(unnorm, axis=-1, keepdims=True)
        probs = unnorm * pl.reciprocal(denom, approx=True)

        # Second output: softmax probs, or (per the in-place PyTorch masked_fill_) the masked
        # logits when output_prob=False.
        attn_ref[0] = probs if output_prob else masked

        # weighted_context = probs @ ctx : (TL, S_pad) @ (S_pad, C) on the MXU.
        weighted = jnp.dot(probs.astype(ctx.dtype), ctx,
                           preferred_element_type=jnp.float32)     # (TL, C) f32

        if output_tilde:
            # h_tilde = tanh(linear_out(cat([weighted, h]))) -- concat folded into two matmuls,
            # output columns padded to a lane-dense width in the wrapper.
            pre = (jnp.dot(weighted, wout_wc_ref[...], preferred_element_type=jnp.float32)
                   + jnp.dot(h, wout_h_ref[...], preferred_element_type=jnp.float32))
            out0_ref[0] = jnp.tanh(pre)
        else:
            out0_ref[0] = weighted

    return kernel


@functools.partial(jax.jit, static_argnames=("output_tilde", "output_prob", "ctx_dtype"))
def soft_dot_attention(x, context, w_in, w_out, mask=None,
                       output_tilde=True, output_prob=True, ctx_dtype=jnp.float32):
    """SoftDotAttention over per-batch context, shared across all query (word) positions.

    x:       (B, L, Q) float32 queries (L queries per batch element)
    context: (B, S, C) float32
    w_in:    (C, Q)      linear_in.weight  (PyTorch out_features x in_features layout)
    w_out:   (Q, Q + C)  linear_out.weight
    mask:    (B, S) nonzero -> masked with -inf, or None
    ctx_dtype: dtype of the HBM->VMEM context transfer (jnp.bfloat16 halves ctx HBM traffic;
               MXU still accumulates in f32, all elementwise math stays f32 — v5e-safe).
    Returns (h_tilde, attn) with shapes (B, L, Q)/(B, L, S) if output_tilde,
    else (weighted_context (B, L, C), attn).
    """
    B, L, Q = x.shape
    _, S, C = context.shape

    # Padding: lane-dense seq dim, sublane-aligned word blocks.
    S_pad = _round_up(max(S, 1), 128)
    TL = min(256, _round_up(L, 8))
    L_pad = _round_up(L, TL)

    if L_pad == L:
        x_p = x.astype(jnp.float32)
    else:
        x_p = jnp.zeros((B, L_pad, Q), jnp.float32).at[:, :L].set(x.astype(jnp.float32))

    if S_pad == S:
        ctx_p = context.astype(ctx_dtype)
    else:
        ctx_p = jnp.zeros((B, S_pad, C), ctx_dtype).at[:, :S].set(context.astype(ctx_dtype))

    mask_p = jnp.zeros((B, 1, S_pad), jnp.int32)
    if mask is not None:
        mask_p = mask_p.at[:, 0, :S].set(mask.astype(jnp.int32))
    if S_pad > S:
        mask_p = mask_p.at[:, :, S:].set(1)   # padded seq positions get zero attention

    # Split linear_out so cat([weighted, h]) @ W_out.T == weighted @ Wc + h @ Wh.
    win_t = w_in.T.astype(jnp.float32)                 # (Q, C)
    wout_t = w_out.T.astype(jnp.float32)               # (Q + C, Q)

    if output_tilde:
        QP = _round_up(max(Q, 1), 128)                 # lane-dense out0 columns
        wout_wc = jnp.zeros((C, QP), jnp.float32).at[:, :Q].set(wout_t[:C])
        wout_h = jnp.zeros((Q, QP), jnp.float32).at[:, :Q].set(wout_t[C:])
        out0_cols = QP
    else:
        # TODO(synk): weighted_context output is not lane-padded when C % 128 != 0
        # (SpeakerDecoder never takes this path).
        wout_wc = wout_t[:C]
        wout_h = wout_t[C:]
        out0_cols = C

    out_shapes = (
        jax.ShapeDtypeStruct((B, L_pad, out0_cols), jnp.float32),
        jax.ShapeDtypeStruct((B, L_pad, S_pad), jnp.float32),
    )

    grid_spec = pltpu.PrefetchScalarGridSpec(
        num_scalar_prefetch=0,
        grid=(B, L_pad // TL),                         # batch (largest independent axis) first
        in_specs=[
            pl.BlockSpec((1, TL, Q), lambda b, l: (b, l, 0)),       # queries
            pl.BlockSpec((1, S_pad, C), lambda b, l: (b, 0, 0)),    # ctx: reused across l
            pl.BlockSpec((1, 1, S_pad), lambda b, l: (b, 0, 0)),    # mask: reused across l
            pl.BlockSpec((Q, C), lambda b, l: (0, 0)),              # W_in^T          (resident)
            pl.BlockSpec(wout_wc.shape, lambda b, l: (0, 0)),       # W_out^T ctx half (resident)
            pl.BlockSpec(wout_h.shape, lambda b, l: (0, 0)),        # W_out^T h half   (resident)
        ],
        out_specs=[
            pl.BlockSpec((1, TL, out0_cols), lambda b, l: (b, l, 0)),
            pl.BlockSpec((1, TL, S_pad), lambda b, l: (b, l, 0)),
        ],
    )

    out0, attn = pl.pallas_call(
        _make_soft_dot_kernel(output_tilde, output_prob),
        out_shape=out_shapes,
        grid_spec=grid_spec,
        compiler_params=pltpu.CompilerParams(
            dimension_semantics=("parallel", "arbitrary"),
            vmem_limit_bytes=_VMEM_LIMIT_BYTES),
    )(x_p, ctx_p, mask_p, win_t, wout_wc, wout_h)

    ret_cols = Q if output_tilde else C
    return out0[:, :L, :ret_cols], attn[:, :L, :S]


# -----------------------------------------------------------------------------
# Vocab projection: (row, vocab)-tiled Pallas matmul (+bias)
# -----------------------------------------------------------------------------
def _linear_kernel(x_ref, w_ref, b_ref, o_ref):
    o_ref[...] = (jnp.dot(x_ref[...], w_ref[...], preferred_element_type=jnp.float32)
                  + b_ref[...]).astype(o_ref.dtype)


@jax.jit
def linear_rows(x, w, b):
    """y = x @ w.T + b.  x:(N,H), w:(V,H), b:(V,).  Rows and vocab both tiled."""
    N, H = x.shape
    V = w.shape[0]
    TN = min(256, _round_up(N, 8))
    N_pad = _round_up(N, TN)
    TV = min(512, _round_up(V, 128))
    V_pad = _round_up(V, TV)

    x_p = jnp.zeros((N_pad, H), jnp.float32).at[:N].set(x.astype(jnp.float32))
    w_t = jnp.zeros((H, V_pad), jnp.float32).at[:, :V].set(w.T.astype(jnp.float32))
    b_p = jnp.zeros((1, V_pad), jnp.float32).at[:, :V].set(b.reshape(1, V).astype(jnp.float32))

    grid_spec = pltpu.PrefetchScalarGridSpec(
        num_scalar_prefetch=0,
        grid=(N_pad // TN, V_pad // TV),
        in_specs=[
            pl.BlockSpec((TN, H), lambda i, j: (i, 0)),   # activation resident across vocab tiles
            pl.BlockSpec((H, TV), lambda i, j: (0, j)),   # weight streamed (double-buffered)
            pl.BlockSpec((1, TV), lambda i, j: (0, j)),
        ],
        out_specs=pl.BlockSpec((TN, TV), lambda i, j: (i, j)),
    )
    y = pl.pallas_call(
        _linear_kernel,
        out_shape=jax.ShapeDtypeStruct((N_pad, V_pad), jnp.float32),
        grid_spec=grid_spec,
        compiler_params=pltpu.CompilerParams(
            dimension_semantics=("parallel", "parallel"),
            vmem_limit_bytes=_VMEM_LIMIT_BYTES),
    )(x_p, w_t, b_p)
    return y[:N, :V]


# -----------------------------------------------------------------------------
# SpeakerDecoder forward (embedding + LSTM in plain JAX, attention/projection in Pallas)
# -----------------------------------------------------------------------------
def _lstm_forward(x, h0, c0, w_ih, w_hh, b_ih, b_hh):
    """Single-layer batch-first LSTM, PyTorch gate order (i, f, g, o)."""
    # Input projection hoisted out of the scan: one well-shaped (B*L, E)@(E, 4H) matmul.
    B, L, E = x.shape
    gates_x = (x.reshape(B * L, E) @ w_ih.T + b_ih).reshape(B, L, -1)

    # TODO(synk): the sequential LSTM recurrence stays in lax.scan (no clean Pallas win here).
    def step(carry, gx_t):
        h, c = carry
        gates = gx_t + h @ w_hh.T + b_hh
        i, f, g, o = jnp.split(gates, 4, axis=-1)
        i = jax.nn.sigmoid(i)
        f = jax.nn.sigmoid(f)
        g = jnp.tanh(g)
        o = jax.nn.sigmoid(o)
        c = f * c + i * g
        h = o * jnp.tanh(c)
        return (h, c), h

    (hT, cT), ys = lax.scan(step, (h0, c0), jnp.swapaxes(gates_x, 0, 1))
    return jnp.swapaxes(ys, 0, 1), hT, cT


@functools.partial(jax.jit, static_argnames=("ctx_dtype",))
def speaker_decoder_forward(params, words, ctx, ctx_mask, h0, c0, ctx_dtype=jnp.float32):
    """SpeakerDecoder.forward (inference: dropout layers are identity).

    words: (B, L) int32 ; ctx: (B, S, H) ; ctx_mask: (B, S) nonzero==masked ;
    h0, c0: (1, B, H)  (PyTorch (num_layers, B, H) convention).
    Returns (logit (B, L, V), h1 (1, B, H), c1 (1, B, H)).
    """
    B, L = words.shape
    H = params["w_hh"].shape[1]

    # TODO(synk): embedding gather stays in plain JAX (XLA gather); padding row is zero.
    embeds = params["embedding"][words]                       # (B, L, E)
    # dropout: identity at inference.

    x, h1, c1 = _lstm_forward(embeds, h0[0], c0[0],
                              params["w_ih"], params["w_hh"],
                              params["b_ih"], params["b_hh"])

    # Attention: no L-fold ctx replication — the kernel reuses each batch's ctx block
    # (mirrors PyTorch's .expand().view() without materializing it).
    h_tilde, _ = soft_dot_attention(x, ctx,
                                    params["w_attn_in"], params["w_attn_out"],
                                    mask=ctx_mask, ctx_dtype=ctx_dtype)

    logit = linear_rows(h_tilde.reshape(B * L, H),
                        params["w_proj"], params["b_proj"]).reshape(B, L, -1)
    return logit, h1[None], c1[None]


# -----------------------------------------------------------------------------
# Pure-JAX references
# -----------------------------------------------------------------------------
def _attention_reference(h, context, w_in, w_out, mask=None):
    """h: (N, Q), context: (N, S, C), mask: (N, S)."""
    target = h @ w_in.T
    scores = jnp.einsum("bsc,bc->bs", context, target)
    if mask is not None:
        scores = jnp.where(mask != 0, -jnp.inf, scores)
    probs = jax.nn.softmax(scores, axis=-1)
    weighted = jnp.einsum("bs,bsc->bc", probs, context)
    h_tilde = jnp.tanh(jnp.concatenate([weighted, h], axis=1) @ w_out.T)
    return h_tilde, probs


def _speaker_decoder_reference(params, words, ctx, ctx_mask, h0, c0):
    B, L = words.shape
    H = params["w_hh"].shape[1]
    embeds = params["embedding"][words]
    x, h1, c1 = _lstm_forward(embeds, h0[0], c0[0], params["w_ih"], params["w_hh"],
                              params["b_ih"], params["b_hh"])
    h_flat = x.reshape(B * L, H)
    ctx_rep = jnp.repeat(ctx, L, axis=0)
    mask_rep = jnp.repeat(ctx_mask.astype(jnp.int32), L, axis=0)
    h_tilde, _ = _attention_reference(h_flat, ctx_rep, params["w_attn_in"],
                                      params["w_attn_out"], mask=mask_rep)
    x_att = h_tilde.reshape(B, L, H)
    logit = (x_att.reshape(B * L, H) @ params["w_proj"].T + params["b_proj"]).reshape(B, L, -1)
    return logit, h1[None], c1[None]


if __name__ == "__main__":
    vocab, emb, hidden = 128, 32, 64
    B, L, S = 2, 6, 8
    padding_idx = 0

    key = jax.random.PRNGKey(0)
    keys = jax.random.split(key, 12)

    def uni(k, shape, fan_in):
        bound = 1.0 / (fan_in ** 0.5)
        return jax.random.uniform(k, shape, jnp.float32, -bound, bound)

    params = {
        "embedding": jax.random.normal(keys[0], (vocab, emb), jnp.float32)
                        .at[padding_idx].set(0.0),
        "w_ih": uni(keys[1], (4 * hidden, emb), hidden),
        "w_hh": uni(keys[2], (4 * hidden, hidden), hidden),
        "b_ih": uni(keys[3], (4 * hidden,), hidden),
        "b_hh": uni(keys[4], (4 * hidden,), hidden),
        "w_attn_in": uni(keys[5], (hidden, hidden), hidden),            # linear_in.weight
        "w_attn_out": uni(keys[6], (hidden, 2 * hidden), 2 * hidden),   # linear_out.weight
        "w_proj": uni(keys[7], (vocab, hidden), hidden),
        "b_proj": uni(keys[8], (vocab,), hidden),
    }

    words = jax.random.randint(keys[9], (B, L), 0, vocab, dtype=jnp.int32)
    ctx = jax.random.normal(keys[10], (B, S, hidden), jnp.float32)
    ctx_mask = jnp.zeros((B, S), jnp.int32).at[1, 6:].set(1)
    h0 = jnp.zeros((1, B, hidden), jnp.float32)
    c0 = jnp.zeros((1, B, hidden), jnp.float32)

    # --- standalone SoftDotAttention kernel check (the Pallas hot path) ---
    hq = jax.random.normal(keys[11], (B, L, hidden), jnp.float32)
    h_tilde, attn = soft_dot_attention(hq, ctx, params["w_attn_in"],
                                       params["w_attn_out"], mask=ctx_mask)
    jax.block_until_ready((h_tilde, attn))
    h_tilde_ref, attn_ref = _attention_reference(
        hq.reshape(B * L, hidden), jnp.repeat(ctx, L, axis=0),
        params["w_attn_in"], params["w_attn_out"],
        mask=jnp.repeat(ctx_mask, L, axis=0))
    assert h_tilde.shape == (B, L, hidden) and attn.shape == (B, L, S)
    assert jnp.allclose(h_tilde.reshape(B * L, hidden), h_tilde_ref, atol=2e-3, rtol=2e-3)
    assert jnp.allclose(attn.reshape(B * L, S), attn_ref, atol=2e-3, rtol=2e-3)
    # masked -> exactly zero probability
    assert bool(jnp.all(jnp.where(ctx_mask[:, None, :] != 0, attn, 0.0) == 0.0))

    # bf16-context variant (halves ctx HBM traffic, MXU f32 accumulation), looser tolerance.
    h_tilde_bf16, _ = soft_dot_attention(hq, ctx, params["w_attn_in"],
                                         params["w_attn_out"], mask=ctx_mask,
                                         ctx_dtype=jnp.bfloat16)
    jax.block_until_ready(h_tilde_bf16)
    assert jnp.allclose(h_tilde_bf16.reshape(B * L, hidden), h_tilde_ref, atol=5e-2, rtol=5e-2)

    # --- full SpeakerDecoder forward ---
    logit, h1, c1 = speaker_decoder_forward(params, words, ctx, ctx_mask, h0, c0)
    jax.block_until_ready((logit, h1, c1))
    logit_ref, h1_ref, c1_ref = _speaker_decoder_reference(params, words, ctx, ctx_mask, h0, c0)
    assert logit.shape == (B, L, vocab)
    assert h1.shape == (1, B, hidden) and c1.shape == (1, B, hidden)
    assert jnp.allclose(logit, logit_ref, atol=2e-3, rtol=2e-3)
    assert jnp.allclose(h1, h1_ref, atol=1e-5, rtol=1e-5)
    assert jnp.allclose(c1, c1_ref, atol=1e-5, rtol=1e-5)

    print("KERNEL_OK")
</pallas_src>

<mosaic_0001>
module attributes {stable_mosaic.version = 11 : i64} {
  func.func @kernel(%arg0: i32, %arg1: i32, %arg2: memref<1x8x64xf32, #tpu.memory_space<vmem>>, %arg3: memref<1x128x64xf32, #tpu.memory_space<vmem>>, %arg4: memref<1x1x128xi32, #tpu.memory_space<vmem>>, %arg5: memref<64x64xf32, #tpu.memory_space<vmem>>, %arg6: memref<64x128xf32, #tpu.memory_space<vmem>>, %arg7: memref<64x128xf32, #tpu.memory_space<vmem>>, %arg8: memref<1x8x128xf32, #tpu.memory_space<vmem>>, %arg9: memref<1x8x128xf32, #tpu.memory_space<vmem>>) attributes {dimension_semantics = [#tpu.dimension_semantics<parallel>, #tpu.dimension_semantics<arbitrary>], iteration_bounds = array<i64: 2, 1>, scalar_prefetch = 0 : i64, scratch_operands = 0 : i64, tpu.core_type = #tpu.core_type<tc>, window_params = [{transform_indices = @transform_0, window_bounds = array<i64: 1, 8, 64>}, {transform_indices = @transform_1, window_bounds = array<i64: 1, 128, 64>}, {transform_indices = @transform_2, window_bounds = array<i64: 1, 1, 128>}, {pipeline_mode = #tpu.pipeline_mode<synchronous>, transform_indices = @transform_3, window_bounds = array<i64: 64, 64>}, {pipeline_mode = #tpu.pipeline_mode<synchronous>, transform_indices = @transform_4, window_bounds = array<i64: 64, 128>}, {pipeline_mode = #tpu.pipeline_mode<synchronous>, transform_indices = @transform_5, window_bounds = array<i64: 64, 128>}, {transform_indices = @transform_6, window_bounds = array<i64: 1, 8, 128>}, {transform_indices = @transform_7, window_bounds = array<i64: 1, 8, 128>}]} {
    %c0 = arith.constant 0 : index
    %c0_0 = arith.constant 0 : index
    %c0_1 = arith.constant 0 : index
    %0 = vector.load %arg2[%c0, %c0_0, %c0_1] : memref<1x8x64xf32, #tpu.memory_space<vmem>>, vector<1x8x64xf32>
    %1 = vector.shape_cast %0 : vector<1x8x64xf32> to vector<8x64xf32>
    %c0_2 = arith.constant 0 : index
    %c0_3 = arith.constant 0 : index
    %c0_4 = arith.constant 0 : index
    %2 = vector.load %arg3[%c0_2, %c0_3, %c0_4] : memref<1x128x64xf32, #tpu.memory_space<vmem>>, vector<1x128x64xf32>
    %3 = vector.shape_cast %2 : vector<1x128x64xf32> to vector<128x64xf32>
    %c0_5 = arith.constant 0 : index
    %c0_6 = arith.constant 0 : index
    %c0_7 = arith.constant 0 : index
    %4 = vector.load %arg4[%c0_5, %c0_6, %c0_7] : memref<1x1x128xi32, #tpu.memory_space<vmem>>, vector<1x1x128xi32>
    %5 = vector.shape_cast %4 : vector<1x1x128xi32> to vector<1x128xi32>
    %c0_8 = arith.constant 0 : index
    %c0_9 = arith.constant 0 : index
    %6 = vector.load %arg5[%c0_8, %c0_9] : memref<64x64xf32, #tpu.memory_space<vmem>>, vector<64x64xf32>
    %cst = arith.constant dense<0.000000e+00> : vector<8x64xf32>
    %7 = tpu.matmul %1, %6, %cst {dimension_numbers = #tpu.dot_dimension_numbers<[1], [0], [0], [1], [0, 0, 1, 1], [], []>} : vector<8x64xf32>, vector<64x64xf32>, vector<8x64xf32> -> vector<8x64xf32>
    %cst_10 = arith.constant dense<0.000000e+00> : vector<8x128xf32>
    %8 = tpu.matmul %7, %3, %cst_10 {dimension_numbers = #tpu.dot_dimension_numbers<[1], [1], [0], [0], [0, 0, 1, 0], [], []>} : vector<8x64xf32>, vector<128x64xf32>, vector<8x128xf32> -> vector<8x128xf32>
    %c0_i32 = arith.constant 0 : i32
    %9 = vector.broadcast %c0_i32 : i32 to vector<1x128xi32>
    %10 = arith.cmpi ne, %5, %9 : vector<1x128xi32>
    %cst_11 = arith.constant 0xFF800000 : f32
    %11 = vector.shape_cast %10 : vector<1x128xi1> to vector<1x128xi1>
    %12 = vector.broadcast %11 : vector<1x128xi1> to vector<8x128xi1>
    %13 = vector.broadcast %cst_11 : f32 to vector<8x128xf32>
    %14 = arith.select %12, %13, %8 : vector<8x128xi1>, vector<8x128xf32>
    %cst_12 = arith.constant dense<0xFF800000> : vector<8xf32>
    %15 = vector.multi_reduction <maximumf>, %14, %cst_12 [1] : vector<8x128xf32> to vector<8xf32>
    %16 = vector.shape_cast %15 : vector<8xf32> to vector<8x1xf32>
    %17 = vector.broadcast %16 : vector<8x1xf32> to vector<8x128xf32>
    %18 = arith.subf %14, %17 : vector<8x128xf32>
    %19 = math.exp %18 : vector<8x128xf32>
    %cst_13 = arith.constant dense<0.000000e+00> : vector<8xf32>
    %20 = vector.multi_reduction <add>, %19, %cst_13 [1] : vector<8x128xf32> to vector<8xf32>
    %21 = vector.shape_cast %20 : vector<8xf32> to vector<8x1xf32>
    %22 = tpu.reciprocal %21 {approx = true} : vector<8x1xf32> -> vector<8x1xf32>
    %23 = vector.broadcast %22 : vector<8x1xf32> to vector<8x128xf32>
    %24 = arith.mulf %19, %23 : vector<8x128xf32>
    %c0_14 = arith.constant 0 : index
    %c0_15 = arith.constant 0 : index
    %c0_16 = arith.constant 0 : index
    %25 = vector.load %arg9[%c0_14, %c0_15, %c0_16] : memref<1x8x128xf32, #tpu.memory_space<vmem>>, vector<1x8x128xf32>
    %26 = vector.shape_cast %25 : vector<1x8x128xf32> to vector<8x128xf32>
    %27 = vector.shape_cast %24 : vector<8x128xf32> to vector<1x8x128xf32>
    tpu.vector_store %arg9[%c0_14, %c0_15, %c0_16], %27 {strides = array<i32>} : memref<1x8x128xf32, #tpu.memory_space<vmem>>, vector<1x8x128xf32>,
    %cst_17 = arith.constant dense<0.000000e+00> : vector<8x64xf32>
    %28 = tpu.matmul %24, %3, %cst_17 {dimension_numbers = #tpu.dot_dimension_numbers<[1], [0], [0], [1], [0, 0, 1, 1], [], []>} : vector<8x128xf32>, vector<128x64xf32>, vector<8x64xf32> -> vector<8x64xf32>
    %c0_18 = arith.constant 0 : index
    %c0_19 = arith.constant 0 : index
    %29 = vector.load %arg6[%c0_18, %c0_19] : memref<64x128xf32, #tpu.memory_space<vmem>>, vector<64x128xf32>
    %cst_20 = arith.constant dense<0.000000e+00> : vector<8x128xf32>
    %30 = tpu.matmul %28, %29, %cst_20 {dimension_numbers = #tpu.dot_dimension_numbers<[1], [0], [0], [1], [0, 0, 1, 1], [], []>} : vector<8x64xf32>, vector<64x128xf32>, vector<8x128xf32> -> vector<8x128xf32>
    %c0_21 = arith.constant 0 : index
    %c0_22 = arith.constant 0 : index
    %31 = vector.load %arg7[%c0_21, %c0_22] : memref<64x128xf32, #tpu.memory_space<vmem>>, vector<64x128xf32>
    %cst_23 = arith.constant dense<0.000000e+00> : vector<8x128xf32>
    %32 = tpu.matmul %1, %31, %cst_23 {dimension_numbers = #tpu.dot_dimension_numbers<[1], [0], [0], [1], [0, 0, 1, 1], [], []>} : vector<8x64xf32>, vector<64x128xf32>, vector<8x128xf32> -> vector<8x128xf32>
    %33 = arith.addf %30, %32 : vector<8x128xf32>
    %34 = math.tanh %33 : vector<8x128xf32>
    %c0_24 = arith.constant 0 : index
    %c0_25 = arith.constant 0 : index
    %c0_26 = arith.constant 0 : index
    %35 = vector.load %arg8[%c0_24, %c0_25, %c0_26] : memref<1x8x128xf32, #tpu.memory_space<vmem>>, vector<1x8x128xf32>
    %36 = vector.shape_cast %35 : vector<1x8x128xf32> to vector<8x128xf32>
    %37 = vector.shape_cast %34 : vector<8x128xf32> to vector<1x8x128xf32>
    tpu.vector_store %arg8[%c0_24, %c0_25, %c0_26], %37 {strides = array<i32>} : memref<1x8x128xf32, #tpu.memory_space<vmem>>, vector<1x8x128xf32>,
    return
  }
  func.func @transform_0(%arg0: i32, %arg1: i32) -> (i32, i32, i32) {
    %c0_i32 = arith.constant 0 : i32
    %c0_i32_0 = arith.constant 0 : i32
    return %arg0, %arg1, %c0_i32 : i32, i32, i32
  }
  func.func @transform_1(%arg0: i32, %arg1: i32) -> (i32, i32, i32) {
    %c0_i32 = arith.constant 0 : i32
    %c0_i32_0 = arith.constant 0 : i32
    %c0_i32_1 = arith.constant 0 : i32
    return %arg0, %c0_i32, %c0_i32_0 : i32, i32, i32
  }
  func.func @transform_2(%arg0: i32, %arg1: i32) -> (i32, i32, i32) {
    %c0_i32 = arith.constant 0 : i32
    %c0_i32_0 = arith.constant 0 : i32
    %c0_i32_1 = arith.constant 0 : i32
    return %arg0, %c0_i32, %c0_i32_0 : i32, i32, i32
  }
  func.func @transform_3(%arg0: i32, %arg1: i32) -> (i32, i32) {
    %c0_i32 = arith.constant 0 : i32
    %c0_i32_0 = arith.constant 0 : i32
    %c0_i32_1 = arith.constant 0 : i32
    return %c0_i32, %c0_i32_0 : i32, i32
  }
  func.func @transform_4(%arg0: i32, %arg1: i32) -> (i32, i32) {
    %c0_i32 = arith.constant 0 : i32
    %c0_i32_0 = arith.constant 0 : i32
    %c0_i32_1 = arith.constant 0 : i32
    return %c0_i32, %c0_i32_0 : i32, i32
  }
  func.func @transform_5(%arg0: i32, %arg1: i32) -> (i32, i32) {
    %c0_i32 = arith.constant 0 : i32
    %c0_i32_0 = arith.constant 0 : i32
    %c0_i32_1 = arith.constant 0 : i32
    return %c0_i32, %c0_i32_0 : i32, i32
  }
  func.func @transform_6(%arg0: i32, %arg1: i32) -> (i32, i32, i32) {
    %c0_i32 = arith.constant 0 : i32
    %c0_i32_0 = arith.constant 0 : i32
    return %arg0, %arg1, %c0_i32 : i32, i32, i32
  }
  func.func @transform_7(%arg0: i32, %arg1: i32) -> (i32, i32, i32) {
    %c0_i32 = arith.constant 0 : i32
    %c0_i32_0 = arith.constant 0 : i32
    return %arg0, %arg1, %c0_i32 : i32, i32, i32
  }
}

</mosaic_0001>

<llo_original>
// kernel: soft_dot_attention.1
$region0: #{soft_dot_attention.1}
  #allocation0 [shape = 'u32[]', space=smem, size = 0x4, offset = 0x4, fixed_abs, tag = 'smem constant byte address 0x4 - core index']
  #allocation1 [shape = 'u32[144,128]{1,0:T(1,128)}', space=vmem, size = 0x12000, scoped, tag = 'internal scratch']
  %s0 = inlined_call_operand.vmem [shape: f32[2,8,64], index: 0, kind: input, shape index: {}]
  %s1 = inlined_call_operand.vmem [shape: f32[2,128,64], index: 1, kind: input, shape index: {}]
  %s2 = inlined_call_operand.vmem [shape: s32[2,1,128], index: 2, kind: input, shape index: {}]
  %s3 = inlined_call_operand.vmem [shape: f32[64,64], index: 3, kind: input, shape index: {}]
  %s4 = inlined_call_operand.vmem [shape: f32[64,128], index: 4, kind: input, shape index: {}]
  %s5 = inlined_call_operand.vmem [shape: f32[64,128], index: 5, kind: input, shape index: {}]
  %s6 = inlined_call_operand.vmem [shape: f32[2,8,128], index: 6, kind: output, shape index: {0}]
  %s7 = inlined_call_operand.vmem [shape: f32[2,8,128], index: 7, kind: output, shape index: {1}]
  %8 = xla_tuple %s6, %s7
  %s9 = sld [smem:[#allocation0]]
  $region65: #{soft_dot_attention.1} parent=0
    _
  %s11 = ssub.s32 1, %s9
  %s12 = scalar_select 0, %s11, %s9
  loop: start=0, step=1, limit=4
  $region2: #{soft_dot_attention.1} parent=0 // loop_pre_header
    _
  $region3: #{soft_dot_attention.1} parent=0 // loop_header
    %s14 = sphi 0, %s18
    %p15 = scmp.ge.s32.totalorder %s14, 4
    %s21 = sphi 0, %s33
    %s22 = sphi 0, %s29
    %s23 = sphi 0, %s21
    %s24 = sphi 0, %s22
    %s25 = sphi 0, %s23
    %s26 = sphi 0, %s24
    %s38 = sphi 0, %s40
    %s41 = sphi 0, %s38
    %s42 = sphi 0, %s41
    %s58 = sphi 0, %s42
    %s64 = sphi 0, %s66
    %s67 = sphi 0, %s64
    %s68 = sphi 0, %s67
    %s84 = sphi 0, %s68
    %s90 = sphi 0, %s92
    %s93 = sphi 0, %s90
    %s94 = sphi 0, %s93
    %s110 = sphi 0, %s94
    %s114 = sphi 0, %s114
    %s116 = sphi 0, %s114
    %s117 = sphi 0, %s116
    %s131 = sphi 0, %s117
    %s135 = sphi 0, %s135
    %s137 = sphi 0, %s135
    %s138 = sphi 0, %s137
    %s152 = sphi 0, %s138
    %s156 = sphi 0, %s156
    %s158 = sphi 0, %s156
    %s159 = sphi 0, %s158
    %s173 = sphi 0, %s159
    %s181 = sphi 0, %s183
    %s184 = sphi 0, %s181
    %s185 = sphi 0, %s184
    %s201 = sphi 0, %s185
    %s209 = sphi 0, %s211
    %s212 = sphi 0, %s209
    %s213 = sphi 0, %s212
    %s229 = sphi 0, %s213
  $region4: #{soft_dot_attention.1} parent=0 // loop_header_branch
    %17 = sbr.rel (%p15) target = $region8
  $region5: #{soft_dot_attention.1} parent=0 // loop_body
    %s19 = ssub.s32 %s14, 1
    %s20 = ssub.s32 %s14, 2
    %s27 = sadd.s32 1, %s22
    %p28 = scmp.ge.s32.totalorder %s27, 1
    %s29 = scalar_select %p28, 0, %s27
    %s30 = sadd.s32 1, %s21
    %s31 = scalar_select %p28, %s30, %s21
    %p32 = scmp.ge.s32.totalorder %s31, 2
    %s33 = scalar_select %p32, 0, %s31
    %s34 = ssub.s32 %s21, %s33
    %s35 = ssub.s32 %s22, %s29
    %s36 = sor.u32 %s34, %s35
    %p37 = scmp.eq.s32.totalorder %s36, 0
    %s39 = sadd.s32 %s38, 1
    %s40 = scalar_select %p37, %s38, %s39
    %p43 = pneg %p37
    %p44 = scmp.eq.s32.totalorder %s14, 1
    %p45 = por %p43, %p44
    %p46 = scmp.ne.s32.totalorder %s38, %s41
    %p47 = scmp.eq.s32.totalorder %s14, 0
    %p48 = por %p46, %p47
    %p49 = scmp.ne.s32.totalorder %s38, %s41
    %p50 = scmp.eq.s32.totalorder %s19, 1
    %p51 = por %p49, %p50
    %p52 = scmp.ne.s32.totalorder %s41, %s42
    %p53 = scmp.eq.s32.totalorder %s19, 0
    %p54 = por %p52, %p53
    %p55 = scmp.ne.s32.totalorder %s41, %s42
    %p56 = scmp.eq.s32.totalorder %s20, 1
    %p57 = por %p55, %p56
    %p59 = scmp.ne.s32.totalorder %s42, %s58
    %p60 = scmp.eq.s32.totalorder %s20, 0
    %p61 = por %p59, %p60
    %s62 = ssub.s32 %s21, %s33
    %p63 = scmp.eq.s32.totalorder %s62, 0
    %s65 = sadd.s32 %s64, 1
    %s66 = scalar_select %p63, %s64, %s65
    %p69 = pneg %p63
    %p70 = scmp.eq.s32.totalorder %s14, 1
    %p71 = por %p69, %p70
    %p72 = scmp.ne.s32.totalorder %s64, %s67
    %p73 = scmp.eq.s32.totalorder %s14, 0
    %p74 = por %p72, %p73
    %p75 = scmp.ne.s32.totalorder %s64, %s67
    %p76 = scmp.eq.s32.totalorder %s19, 1
    %p77 = por %p75, %p76
    %p78 = scmp.ne.s32.totalorder %s67, %s68
    %p79 = scmp.eq.s32.totalorder %s19, 0
    %p80 = por %p78, %p79
    %p81 = scmp.ne.s32.totalorder %s67, %s68
    %p82 = scmp.eq.s32.totalorder %s20, 1
    %p83 = por %p81, %p82
    %p85 = scmp.ne.s32.totalorder %s68, %s84
    %p86 = scmp.eq.s32.totalorder %s20, 0
    %p87 = por %p85, %p86
    %s88 = ssub.s32 %s21, %s33
    %p89 = scmp.eq.s32.totalorder %s88, 0
    %s91 = sadd.s32 %s90, 1
    %s92 = scalar_select %p89, %s90, %s91
    %p95 = pneg %p89
    %p96 = scmp.eq.s32.totalorder %s14, 1
    %p97 = por %p95, %p96
    %p98 = scmp.ne.s32.totalorder %s90, %s93
    %p99 = scmp.eq.s32.totalorder %s14, 0
    %p100 = por %p98, %p99
    %p101 = scmp.ne.s32.totalorder %s90, %s93
    %p102 = scmp.eq.s32.totalorder %s19, 1
    %p103 = por %p101, %p102
    %p104 = scmp.ne.s32.totalorder %s93, %s94
    %p105 = scmp.eq.s32.totalorder %s19, 0
    %p106 = por %p104, %p105
    %p107 = scmp.ne.s32.totalorder %s93, %s94
    %p108 = scmp.eq.s32.totalorder %s20, 1
    %p109 = por %p107, %p108
    %p111 = scmp.ne.s32.totalorder %s94, %s110
    %p112 = scmp.eq.s32.totalorder %s20, 0
    %p113 = por %p111, %p112
    %s115 = sadd.s32 %s114, 1
    %p118 = scmp.eq.s32.totalorder %s14, 1
    %p119 = scmp.ne.s32.totalorder %s114, %s116
    %p120 = scmp.eq.s32.totalorder %s14, 0
    %p121 = por %p119, %p120
    %p122 = scmp.ne.s32.totalorder %s114, %s116
    %p123 = scmp.eq.s32.totalorder %s19, 1
    %p124 = por %p122, %p123
    %p125 = scmp.ne.s32.totalorder %s116, %s117
    %p126 = scmp.eq.s32.totalorder %s19, 0
    %p127 = por %p125, %p126
    %p128 = scmp.ne.s32.totalorder %s116, %s117
    %p129 = scmp.eq.s32.totalorder %s20, 1
    %p130 = por %p128, %p129
    %p132 = scmp.ne.s32.totalorder %s117, %s131
    %p133 = scmp.eq.s32.totalorder %s20, 0
    %p134 = por %p132, %p133
    %s136 = sadd.s32 %s135, 1
    %p139 = scmp.eq.s32.totalorder %s14, 1
    %p140 = scmp.ne.s32.totalorder %s135, %s137
    %p141 = scmp.eq.s32.totalorder %s14, 0
    %p142 = por %p140, %p141
    %p143 = scmp.ne.s32.totalorder %s135, %s137
    %p144 = scmp.eq.s32.totalorder %s19, 1
    %p145 = por %p143, %p144
    %p146 = scmp.ne.s32.totalorder %s137, %s138
    %p147 = scmp.eq.s32.totalorder %s19, 0
    %p148 = por %p146, %p147
    %p149 = scmp.ne.s32.totalorder %s137, %s138
    %p150 = scmp.eq.s32.totalorder %s20, 1
    %p151 = por %p149, %p150
    %p153 = scmp.ne.s32.totalorder %s138, %s152
    %p154 = scmp.eq.s32.totalorder %s20, 0
    %p155 = por %p153, %p154
    %s157 = sadd.s32 %s156, 1
    %p160 = scmp.eq.s32.totalorder %s14, 1
    %p161 = scmp.ne.s32.totalorder %s156, %s158
    %p162 = scmp.eq.s32.totalorder %s14, 0
    %p163 = por %p161, %p162
    %p164 = scmp.ne.s32.totalorder %s156, %s158
    %p165 = scmp.eq.s32.totalorder %s19, 1
    %p166 = por %p164, %p165
    %p167 = scmp.ne.s32.totalorder %s158, %s159
    %p168 = scmp.eq.s32.totalorder %s19, 0
    %p169 = por %p167, %p168
    %p170 = scmp.ne.s32.totalorder %s158, %s159
    %p171 = scmp.eq.s32.totalorder %s20, 1
    %p172 = por %p170, %p171
    %p174 = scmp.ne.s32.totalorder %s159, %s173
    %p175 = scmp.eq.s32.totalorder %s20, 0
    %p176 = por %p174, %p175
    %s177 = ssub.s32 %s21, %s33
    %s178 = ssub.s32 %s22, %s29
    %s179 = sor.u32 %s177, %s178
    %p180 = scmp.eq.s32.totalorder %s179, 0
    %s182 = sadd.s32 %s181, 1
    %s183 = scalar_select %p180, %s181, %s182
    %p186 = pneg %p180
    %p187 = scmp.eq.s32.totalorder %s14, 1
    %p188 = por %p186, %p187
    %p189 = scmp.ne.s32.totalorder %s181, %s184
    %p190 = scmp.eq.s32.totalorder %s14, 0
    %p191 = por %p189, %p190
    %p192 = scmp.ne.s32.totalorder %s181, %s184
    %p193 = scmp.eq.s32.totalorder %s19, 1
    %p194 = por %p192, %p193
    %p195 = scmp.ne.s32.totalorder %s184, %s185
    %p196 = scmp.eq.s32.totalorder %s19, 0
    %p197 = por %p195, %p196
    %p198 = scmp.ne.s32.totalorder %s184, %s185
    %p199 = scmp.eq.s32.totalorder %s20, 1
    %p200 = por %p198, %p199
    %p202 = scmp.ne.s32.totalorder %s185, %s201
    %p203 = scmp.eq.s32.totalorder %s20, 0
    %p204 = por %p202, %p203
    %s205 = ssub.s32 %s21, %s33
    %s206 = ssub.s32 %s22, %s29
    %s207 = sor.u32 %s205, %s206
    %p208 = scmp.eq.s32.totalorder %s207, 0
    %s210 = sadd.s32 %s209, 1
    %s211 = scalar_select %p208, %s209, %s210
    %p214 = pneg %p208
    %p215 = scmp.eq.s32.totalorder %s14, 1
    %p216 = por %p214, %p215
    %p217 = scmp.ne.s32.totalorder %s209, %s212
    %p218 = scmp.eq.s32.totalorder %s14, 0
    %p219 = por %p217, %p218
    %p220 = scmp.ne.s32.totalorder %s209, %s212
    %p221 = scmp.eq.s32.totalorder %s19, 1
    %p222 = por %p220, %p221
    %p223 = scmp.ne.s32.totalorder %s212, %s213
    %p224 = scmp.eq.s32.totalorder %s19, 0
    %p225 = por %p223, %p224
    %p226 = scmp.ne.s32.totalorder %s212, %s213
    %p227 = scmp.eq.s32.totalorder %s20, 1
    %p228 = por %p226, %p227
    %p230 = scmp.ne.s32.totalorder %s213, %s229
    %p231 = scmp.eq.s32.totalorder %s20, 0
    %p232 = por %p230, %p231
    %p233 = scmp.le.s32.totalorder 1, %s14
    %p234 = scmp.lt.s32.totalorder %s14, 3
    %p235 = pnand %p233, %p234
    %p236 = pneg %p235
    // Predicated region
    $region9: #{soft_dot_attention.1} parent=5 // pred_check
      _
    $region10: #{soft_dot_attention.1} parent=5 // pred_check_branch
      %238 = sbr.rel (%p235) target = $region12
    $region11: #{soft_dot_attention.1} parent=5 // pred_region
      %s239 = ssub.s32 %s14, 1
      // Predicated region
      $region13: #{soft_dot_attention.1} parent=11 // pred_check
        %p240 = pneg %p127
      $region14: #{soft_dot_attention.1} parent=11 // pred_check_branch
        %242 = sbr.rel (%p240) target = $region16
      $region15: #{soft_dot_attention.1} parent=11 // pred_region
        _
      $region16: #{soft_dot_attention.1} parent=11 // pred_fallthru
        _
      // Predicated region
      $region17: #{soft_dot_attention.1} parent=11 // pred_check
        %p243 = pneg %p148
      $region18: #{soft_dot_attention.1} parent=11 // pred_check_branch
        %245 = sbr.rel (%p243) target = $region20
      $region19: #{soft_dot_attention.1} parent=11 // pred_region
        _
      $region20: #{soft_dot_attention.1} parent=11 // pred_fallthru
        _
      // Predicated region
      $region21: #{soft_dot_attention.1} parent=11 // pred_check
        %p246 = pneg %p169
      $region22: #{soft_dot_attention.1} parent=11 // pred_check_branch
        %248 = sbr.rel (%p246) target = $region24
      $region23: #{soft_dot_attention.1} parent=11 // pred_region
        _
      $region24: #{soft_dot_attention.1} parent=11 // pred_fallthru
        _
    $region12: #{soft_dot_attention.1} parent=5 // pred_fallthru
      _
    %p249 = scmp.lt.s32.totalorder %s14, 2
    // Predicated region
    $region25: #{soft_dot_attention.1} parent=5 // pred_check
      %p250 = pneg %p249
    $region26: #{soft_dot_attention.1} parent=5 // pred_check_branch
      %252 = sbr.rel (%p250) target = $region28
    $region27: #{soft_dot_attention.1} parent=5 // pred_region
      // Predicated region
      $region29: #{soft_dot_attention.1} parent=27 // pred_check
        %p253 = pneg %p48
      $region30: #{soft_dot_attention.1} parent=27 // pred_check_branch
        %255 = sbr.rel (%p253) target = $region32
      $region31: #{soft_dot_attention.1} parent=27 // pred_region
        %p256 = scmp.lt.s32.totalorder %s21, 1
        %s257 = scalar_select %p256, %s21, 1
        %p258 = scmp.lt.s32.totalorder %s22, 0
        %s259 = scalar_select %p258, %s22, 0
        %s260 = sadd.s32 %s259, %s257
        %s261 = smul.addr %s260, 8
        %s262 = scalar_lea.vmem %s0, %s261
      $region32: #{soft_dot_attention.1} parent=27 // pred_fallthru
        _
      // Predicated region
      $region33: #{soft_dot_attention.1} parent=27 // pred_check
        %p263 = pneg %p74
      $region34: #{soft_dot_attention.1} parent=27 // pred_check_branch
        %265 = sbr.rel (%p263) target = $region36
      $region35: #{soft_dot_attention.1} parent=27 // pred_region
        %p266 = scmp.lt.s32.totalorder %s21, 1
        %s267 = scalar_select %p266, %s21, 1
        %s268 = smul.addr %s267, 16
        %s269 = smul.addr %s268, 8
        %s270 = scalar_lea.vmem %s1, %s269
      $region36: #{soft_dot_attention.1} parent=27 // pred_fallthru
        _
      // Predicated region
      $region37: #{soft_dot_attention.1} parent=27 // pred_check
        %p271 = pneg %p100
      $region38: #{soft_dot_attention.1} parent=27 // pred_check_branch
        %273 = sbr.rel (%p271) target = $region40
      $region39: #{soft_dot_attention.1} parent=27 // pred_region
        %p274 = scmp.lt.s32.totalorder %s21, 1
        %s275 = scalar_select %p274, %s21, 1
        %s276 = scalar_lea.vmem %s2, %s275
      $region40: #{soft_dot_attention.1} parent=27 // pred_fallthru
        _
    $region28: #{soft_dot_attention.1} parent=5 // pred_fallthru
      _
    %p277 = scmp.le.s32.totalorder 1, %s14
    %p278 = scmp.lt.s32.totalorder %s14, 3
    %p279 = pnand %p277, %p278
    %p280 = pneg %p279
    // Predicated region
    $region41: #{soft_dot_attention.1} parent=5 // pred_check
      _
    $region42: #{soft_dot_attention.1} parent=5 // pred_check_branch
      %282 = sbr.rel (%p279) target = $region44
    $region43: #{soft_dot_attention.1} parent=5 // pred_region
      %s283 = ssub.s32 %s14, 1
      %p284 = scmp.lt.s32.totalorder %s23, 1
      %s285 = scalar_select %p284, %s23, 1
      %p286 = scmp.lt.s32.totalorder %s24, 0
      %s287 = scalar_select %p286, %s24, 0
      %s288 = sadd.s32 %s287, %s285
      %s289 = smul.addr %s288, 8
      %s290 = scalar_lea.vmem %s0, %s289
      %p291 = pneg %p54
      %p292 = pneg %p51
      %p293 = scmp.lt.s32.totalorder %s23, 1
      %s294 = scalar_select %p293, %s23, 1
      %s295 = smul.addr %s294, 16
      %s296 = smul.addr %s295, 8
      %s297 = scalar_lea.vmem %s1, %s296
      %p298 = pneg %p80
      %p299 = pneg %p77
      %p300 = scmp.lt.s32.totalorder %s23, 1
      %s301 = scalar_select %p300, %s23, 1
      %s302 = scalar_lea.vmem %s2, %s301
      %p303 = pneg %p106
      %p304 = pneg %p103
      %p305 = pneg %p127
      %p306 = pneg %p124
      %p307 = pneg %p148
      %p308 = pneg %p145
      %p309 = pneg %p169
      %p310 = pneg %p166
      %p311 = pneg %p197
      %p312 = pneg %p194
      %p313 = scmp.lt.s32.totalorder %s23, 1
      %s314 = scalar_select %p313, %s23, 1
      %p315 = scmp.lt.s32.totalorder %s24, 0
      %s316 = scalar_select %p315, %s24, 0
      %s317 = sadd.s32 %s316, %s314
      %s318 = smul.addr %s317, 8
      %s319 = scalar_lea.vmem %s6, %s318
      %p320 = pneg %p225
      %p321 = pneg %p222
      %p322 = scmp.lt.s32.totalorder %s23, 1
      %s323 = scalar_select %p322, %s23, 1
      %p324 = scmp.lt.s32.totalorder %s24, 0
      %s325 = scalar_select %p324, %s24, 0
      %s326 = sadd.s32 %s325, %s323
      %s327 = smul.addr %s326, 8
      %s328 = scalar_lea.vmem %s7, %s327
      %p329 = scmp.lt.s32.totalorder %s23, 1
      %s330 = scalar_select %p329, %s23, 1
      %p331 = scmp.lt.s32.totalorder %s24, 0
      %s332 = scalar_select %p331, %s24, 0
      %s333 = sadd.s32 %s332, %s330
      %s334 = smul.addr %s333, 8
      %s335 = scalar_lea.vmem %s0, %s334
      %p336 = scmp.lt.s32.totalorder %s23, 1
      %s337 = scalar_select %p336, %s23, 1
      %s338 = smul.addr %s337, 16
      %s339 = smul.addr %s338, 8
      %s340 = scalar_lea.vmem %s1, %s339
      %p341 = scmp.lt.s32.totalorder %s23, 1
      %s342 = scalar_select %p341, %s23, 1
      %s343 = scalar_lea.vmem %s2, %s342
      %p344 = scmp.lt.s32.totalorder %s23, 1
      %s345 = scalar_select %p344, %s23, 1
      %p346 = scmp.lt.s32.totalorder %s24, 0
      %s347 = scalar_select %p346, %s24, 0
      %s348 = sadd.s32 %s347, %s345
      %s349 = smul.addr %s348, 8
      %s350 = scalar_lea.vmem %s6, %s349
      %p351 = scmp.lt.s32.totalorder %s23, 1
      %s352 = scalar_select %p351, %s23, 1
      %p353 = scmp.lt.s32.totalorder %s24, 0
      %s354 = scalar_select %p353, %s24, 0
      %s355 = sadd.s32 %s354, %s352
      %s356 = smul.addr %s355, 8
      %s357 = scalar_lea.vmem %s7, %s356
      %v358 = vld [vmem:[%s335] sm:$0xff]
      %v359 = vld [vmem:[%s340] sm:$0xff]
      %v360 = vld [vmem:[%s340 + $0x8] sm:$0xff]
      %v361 = vld [vmem:[%s340 + $0x10] sm:$0xff]
      %v362 = vld [vmem:[%s340 + $0x18] sm:$0xff]
      %v363 = vld [vmem:[%s340 + $0x20] sm:$0xff]
      %v364 = vld [vmem:[%s340 + $0x28] sm:$0xff]
      %v365 = vld [vmem:[%s340 + $0x30] sm:$0xff]
      %v366 = vld [vmem:[%s340 + $0x38] sm:$0xff]
      %v367 = vld [vmem:[%s340 + $0x40] sm:$0xff]
      %v368 = vld [vmem:[%s340 + $0x48] sm:$0xff]
      %v369 = vld [vmem:[%s340 + $0x50] sm:$0xff]
      %v370 = vld [vmem:[%s340 + $0x58] sm:$0xff]
      %v371 = vld [vmem:[%s340 + $0x60] sm:$0xff]
      %v372 = vld [vmem:[%s340 + $0x68] sm:$0xff]
      %v373 = vld [vmem:[%s340 + $0x70] sm:$0xff]
      %v374 = vld [vmem:[%s340 + $0x78] sm:$0xff]
      %v375 = vld [vmem:[%s343] sm:$0x1]
      %v376 = vld [vmem:[%s3] sm:$0xff]
      %v377 = vld [vmem:[%s3 + $0x8] sm:$0xff]
      %v378 = vld [vmem:[%s3 + $0x10] sm:$0xff]
      %v379 = vld [vmem:[%s3 + $0x18] sm:$0xff]
      %v380 = vld [vmem:[%s3 + $0x20] sm:$0xff]
      %v381 = vld [vmem:[%s3 + $0x28] sm:$0xff]
      %v382 = vld [vmem:[%s3 + $0x30] sm:$0xff]
      %v383 = vld [vmem:[%s3 + $0x38] sm:$0xff]
      %vm384 = vcmask 523264
      %v386 = vsel %vm384, %v358, 0
      %388 = vmatprep.subr.mxu0 0.0
      %389 = vmatpush1.msra.mxu0 %v376
      %390 = vmatprep.subr.mxu0 0.0
      %391 = vmatpush1.msra.mxu0 %v377
      %392 = vmatprep.subr.mxu0 0.0
      %393 = vmatpush1.msra.mxu0 %v378
      %394 = vmatprep.subr.mxu0 0.0
      %395 = vmatpush1.msra.mxu0 %v379
      %396 = vmatprep.subr.mxu0 0.0
      %397 = vmatpush1.msra.mxu0 %v380
      %398 = vmatprep.subr.mxu0 0.0
      %399 = vmatpush1.msra.mxu0 %v381
      %400 = vmatprep.subr.mxu0 0.0
      %401 = vmatpush1.msra.mxu0 %v382
      %402 = vmatprep.subr.mxu0 0.0
      %403 = vmatpush1.msra.mxu0 %v383
      %404 = vmatprep.subr.mxu0 0.0
      %405 = vmatpush1.msra.mxu0 0.0
      %406 = vmatprep.subr.mxu0 0.0
      %407 = vmatpush1.msra.mxu0 0.0
      %408 = vmatprep.subr.mxu0 0.0
      %409 = vmatpush1.msra.mxu0 0.0
      %410 = vmatprep.subr.mxu0 0.0
      %411 = vmatpush1.msra.mxu0 0.0
      %412 = vmatprep.subr.mxu0 0.0
      %413 = vmatpush1.msra.mxu0 0.0
      %414 = vmatprep.subr.mxu0 0.0
      %415 = vmatpush1.msra.mxu0 0.0
      %416 = vmatprep.subr.mxu0 0.0
      %417 = vmatpush1.msra.mxu0 0.0
      %418 = vmatprep.subr.mxu0 0.0
      %419 = vmatpush1.msra.mxu0 0.0
      %420 = vmatprep.subr.mxu0 0.0
      %421 = vmatpush1.msra.mxu0 0.0
      %422 = vmatprep.subr.mxu0 0.0
      %423 = vmatpush1.msra.mxu0 0.0
      %424 = vmatprep.subr.mxu0 0.0
      %425 = vmatpush1.msra.mxu0 0.0
      %426 = vmatprep.subr.mxu0 0.0
      %427 = vmatpush1.msra.mxu0 0.0
      %428 = vmatprep.subr.mxu0 0.0
      %429 = vmatpush1.msra.mxu0 0.0
      %430 = vmatprep.subr.mxu0 0.0
      %431 = vmatpush1.msra.mxu0 0.0
      %432 = vmatprep.subr.mxu0 0.0
      %433 = vmatpush1.msra.mxu0 0.0
      %434 = vmatprep.subr.mxu0 0.0
      %435 = vmatpush1.msra.mxu0 0.0
      %436 = vmatprep.subr.mxu0 0.0
      %437 = vmatpush1.msra.mxu0 0.0
      %438 = vmatprep.subr.mxu0 0.0
      %439 = vmatpush1.msra.mxu0 0.0
      %440 = vmatprep.subr.mxu0 0.0
      %441 = vmatpush1.msra.mxu0 0.0
      %442 = vmatprep.subr.mxu0 0.0
      %443 = vmatpush1.msra.mxu0 0.0
      %444 = vmatprep.subr.mxu0 0.0
      %445 = vmatpush1.msra.mxu0 0.0
      %446 = vmatprep.subr.mxu0 0.0
      %447 = vmatpush1.msra.mxu0 0.0
      %448 = vmatprep.subr.mxu0 0.0
      %449 = vmatpush1.msra.mxu0 0.0
      %450 = vmatprep.subr.mxu0 0.0
      %451 = vmatpush1.msra.mxu0 0.0
      %452 = vmatprep.mubr.f32.mxu0 0.0
      %453 = vmatmul.mubr.f32.gmra.mrb[0].mxu0 %v386
      %v454 = vpop.f32.mrb[0].mxu0
      %v455 = vadd.f32 0.0, %v454
      %v456 = vpop.f32.mrb[0].mxu0
      %457 = vdwg.mxu0
      %v459 = vsel %vm384, %v455, 0
      %v462 = vsel %vm384, %v359, 0
      %v465 = vsel %vm384, %v360, 0
      %v468 = vsel %vm384, %v361, 0
      %v471 = vsel %vm384, %v362, 0
      %v474 = vsel %vm384, %v363, 0
      %v477 = vsel %vm384, %v364, 0
      %v480 = vsel %vm384, %v365, 0
      %v483 = vsel %vm384, %v366, 0
      %v486 = vsel %vm384, %v367, 0
      %v489 = vsel %vm384, %v368, 0
      %v492 = vsel %vm384, %v369, 0
      %v495 = vsel %vm384, %v370, 0
      %v498 = vsel %vm384, %v371, 0
      %v501 = vsel %vm384, %v372, 0
      %v504 = vsel %vm384, %v373, 0
      %v507 = vsel %vm384, %v374, 0
      %509 = vmatprep.subr.mxu0 0.0
      %510 = vmatpush1.xpose.msra.mxu0 %v462
      %511 = vmatprep.subr.mxu0 0.0
      %512 = vmatpush1.xpose.msra.mxu0 %v465
      %513 = vmatprep.subr.mxu0 0.0
      %514 = vmatpush1.xpose.msra.mxu0 %v468
      %515 = vmatprep.subr.mxu0 0.0
      %516 = vmatpush1.xpose.msra.mxu0 %v471
      %517 = vmatprep.subr.mxu0 0.0
      %518 = vmatpush1.xpose.msra.mxu0 %v474
      %519 = vmatprep.subr.mxu0 0.0
      %520 = vmatpush1.xpose.msra.mxu0 %v477
      %521 = vmatprep.subr.mxu0 0.0
      %522 = vmatpush1.xpose.msra.mxu0 %v480
      %523 = vmatprep.subr.mxu0 0.0
      %524 = vmatpush1.xpose.msra.mxu0 %v483
      %525 = vmatprep.subr.mxu0 0.0
      %526 = vmatpush1.xpose.msra.mxu0 %v486
      %527 = vmatprep.subr.mxu0 0.0
      %528 = vmatpush1.xpose.msra.mxu0 %v489
      %529 = vmatprep.subr.mxu0 0.0
      %530 = vmatpush1.xpose.msra.mxu0 %v492
      %531 = vmatprep.subr.mxu0 0.0
      %532 = vmatpush1.xpose.msra.mxu0 %v495
      %533 = vmatprep.subr.mxu0 0.0
      %534 = vmatpush1.xpose.msra.mxu0 %v498
      %535 = vmatprep.subr.mxu0 0.0
      %536 = vmatpush1.xpose.msra.mxu0 %v501
      %537 = vmatprep.subr.mxu0 0.0
      %538 = vmatpush1.xpose.msra.mxu0 %v504
      %539 = vmatprep.subr.mxu0 0.0
      %540 = vmatpush1.xpose.msra.mxu0 %v507
      %541 = vmatprep.subr.mxu0 0.0
      %542 = vmatpush1.xpose.msra.mxu0 0.0
      %543 = vmatprep.subr.mxu0 0.0
      %544 = vmatpush1.xpose.msra.mxu0 0.0
      %545 = vmatprep.subr.mxu0 0.0
      %546 = vmatpush1.xpose.msra.mxu0 0.0
      %547 = vmatprep.subr.mxu0 0.0
      %548 = vmatpush1.xpose.msra.mxu0 0.0
      %549 = vmatprep.subr.mxu0 0.0
      %550 = vmatpush1.xpose.msra.mxu0 0.0
      %551 = vmatprep.subr.mxu0 0.0
      %552 = vmatpush1.xpose.msra.mxu0 0.0
      %553 = vmatprep.subr.mxu0 0.0
      %554 = vmatpush1.xpose.msra.mxu0 0.0
      %555 = vmatprep.subr.mxu0 0.0
      %556 = vmatpush1.xpose.msra.mxu0 0.0
      %557 = vmatprep.subr.mxu0 0.0
      %558 = vmatpush1.xpose.msra.mxu0 0.0
      %559 = vmatprep.subr.mxu0 0.0
      %560 = vmatpush1.xpose.msra.mxu0 0.0
      %561 = vmatprep.subr.mxu0 0.0
      %562 = vmatpush1.xpose.msra.mxu0 0.0
      %563 = vmatprep.subr.mxu0 0.0
      %564 = vmatpush1.xpose.msra.mxu0 0.0
      %565 = vmatprep.subr.mxu0 0.0
      %566 = vmatpush1.xpose.msra.mxu0 0.0
      %567 = vmatprep.subr.mxu0 0.0
      %568 = vmatpush1.xpose.msra.mxu0 0.0
      %569 = vmatprep.subr.mxu0 0.0
      %570 = vmatpush1.xpose.msra.mxu0 0.0
      %571 = vmatprep.subr.mxu0 0.0
      %572 = vmatpush1.xpose.msra.mxu0 0.0
      %573 = vmatprep.mubr.f32.mxu0 0.0
      %574 = vmatmul.mubr.f32.gmra.mrb[0].mxu0 %v459
      %v575 = vpop.f32.mrb[0].mxu0
      %v576 = vadd.f32 0.0, %v575
      %v577 = vpop.f32.mrb[0].mxu0
      %578 = vdwg.mxu0
      %vm579 = vcmp.ne.s32.totalorder %v375, 0
      %v580 = vsel %vm579, 1, 0
      %v581 = vlaneseq
      %v582 = vshrl.u32 %v581, 7
      %v583 = vsub.s32 0, %v582
      %v584 = vrot.slane %v580, %v583
      %vm585 = vcmp.eq.s32.totalorder %v584, 1
      %v586 = vsel %vm585, -inf, %v576
      %587 = vmax.xlane.f32.xlu0 %v586
      %v588 = vpop.xlane.xlu0 %587
      %v589 = vsub.f32 %v586, %v588
      %v590 = vmul.f32 %v589, 1.442695
      %v591 = vpow.pop %v590
      %592 = vadd.xlane.f32.xlu0 %v591
      %v593 = vpop.xlane.xlu0 %592
      %v594 = vrcp.pop %v593
      %v595 = vmul.f32 %v591, %v594
      %596 = vst [vmem:[%s357] sm:$0xff] %v595
      %597 = vmatprep.subr.mxu0 0.0
      %598 = vmatpush1.msra.mxu0 %v359
      %599 = vmatprep.subr.mxu0 0.0
      %600 = vmatpush1.msra.mxu0 %v360
      %601 = vmatprep.subr.mxu0 0.0
      %602 = vmatpush1.msra.mxu0 %v361
      %603 = vmatprep.subr.mxu0 0.0
      %604 = vmatpush1.msra.mxu0 %v362
      %605 = vmatprep.subr.mxu0 0.0
      %606 = vmatpush1.msra.mxu0 %v363
      %607 = vmatprep.subr.mxu0 0.0
      %608 = vmatpush1.msra.mxu0 %v364
      %609 = vmatprep.subr.mxu0 0.0
      %610 = vmatpush1.msra.mxu0 %v365
      %611 = vmatprep.subr.mxu0 0.0
      %612 = vmatpush1.msra.mxu0 %v366
      %613 = vmatprep.subr.mxu0 0.0
      %614 = vmatpush1.msra.mxu0 %v367
      %615 = vmatprep.subr.mxu0 0.0
      %616 = vmatpush1.msra.mxu0 %v368
      %617 = vmatprep.subr.mxu0 0.0
      %618 = vmatpush1.msra.mxu0 %v369
      %619 = vmatprep.subr.mxu0 0.0
      %620 = vmatpush1.msra.mxu0 %v370
      %621 = vmatprep.subr.mxu0 0.0
      %622 = vmatpush1.msra.mxu0 %v371
      %623 = vmatprep.subr.mxu0 0.0
      %624 = vmatpush1.msra.mxu0 %v372
      %625 = vmatprep.subr.mxu0 0.0
      %626 = vmatpush1.msra.mxu0 %v373
      %627 = vmatprep.subr.mxu0 0.0
      %628 = vmatpush1.msra.mxu0 %v374
      %629 = vmatprep.subr.mxu0 0.0
      %630 = vmatpush1.msra.mxu0 0.0
      %631 = vmatprep.subr.mxu0 0.0
      %632 = vmatpush1.msra.mxu0 0.0
      %633 = vmatprep.subr.mxu0 0.0
      %634 = vmatpush1.msra.mxu0 0.0
      %635 = vmatprep.subr.mxu0 0.0
      %636 = vmatpush1.msra.mxu0 0.0
      %637 = vmatprep.subr.mxu0 0.0
      %638 = vmatpush1.msra.mxu0 0.0
      %639 = vmatprep.subr.mxu0 0.0
      %640 = vmatpush1.msra.mxu0 0.0
      %641 = vmatprep.subr.mxu0 0.0
      %642 = vmatpush1.msra.mxu0 0.0
      %643 = vmatprep.subr.mxu0 0.0
      %644 = vmatpush1.msra.mxu0 0.0
      %645 = vmatprep.subr.mxu0 0.0
      %646 = vmatpush1.msra.mxu0 0.0
      %647 = vmatprep.subr.mxu0 0.0
      %648 = vmatpush1.msra.mxu0 0.0
      %649 = vmatprep.subr.mxu0 0.0
      %650 = vmatpush1.msra.mxu0 0.0
      %651 = vmatprep.subr.mxu0 0.0
      %652 = vmatpush1.msra.mxu0 0.0
      %653 = vmatprep.subr.mxu0 0.0
      %654 = vmatpush1.msra.mxu0 0.0
      %655 = vmatprep.subr.mxu0 0.0
      %656 = vmatpush1.msra.mxu0 0.0
      %657 = vmatprep.subr.mxu0 0.0
      %658 = vmatpush1.msra.mxu0 0.0
      %659 = vmatprep.subr.mxu0 0.0
      %660 = vmatpush1.msra.mxu0 0.0
      %661 = vmatprep.mubr.f32.mxu0 0.0
      %662 = vmatmul.mubr.f32.gmra.mrb[0].mxu0 %v595
      %v663 = vpop.f32.mrb[0].mxu0
      %v664 = vadd.f32 0.0, %v663
      %v665 = vpop.f32.mrb[0].mxu0
      %666 = vdwg.mxu0
      %v667 = vld [vmem:[%s4] sm:$0xff]
      %v668 = vld [vmem:[%s4 + $0x8] sm:$0xff]
      %v669 = vld [vmem:[%s4 + $0x10] sm:$0xff]
      %v670 = vld [vmem:[%s4 + $0x18] sm:$0xff]
      %v671 = vld [vmem:[%s4 + $0x20] sm:$0xff]
      %v672 = vld [vmem:[%s4 + $0x28] sm:$0xff]
      %v673 = vld [vmem:[%s4 + $0x30] sm:$0xff]
      %v674 = vld [vmem:[%s4 + $0x38] sm:$0xff]
      %v675 = vld [vmem:[%s5] sm:$0xff]
      %v676 = vld [vmem:[%s5 + $0x8] sm:$0xff]
      %v677 = vld [vmem:[%s5 + $0x10] sm:$0xff]
      %v678 = vld [vmem:[%s5 + $0x18] sm:$0xff]
      %v679 = vld [vmem:[%s5 + $0x20] sm:$0xff]
      %v680 = vld [vmem:[%s5 + $0x28] sm:$0xff]
      %v681 = vld [vmem:[%s5 + $0x30] sm:$0xff]
      %v682 = vld [vmem:[%s5 + $0x38] sm:$0xff]
      %683 = vmatprep.subr.mxu0 0.0
      %684 = vmatpush1.msra.mxu0 %v675
      %685 = vmatprep.subr.mxu0 0.0
      %686 = vmatpush1.msra.mxu0 %v676
      %687 = vmatprep.subr.mxu0 0.0
      %688 = vmatpush1.msra.mxu0 %v677
      %689 = vmatprep.subr.mxu0 0.0
      %690 = vmatpush1.msra.mxu0 %v678
      %691 = vmatprep.subr.mxu0 0.0
      %692 = vmatpush1.msra.mxu0 %v679
      %693 = vmatprep.subr.mxu0 0.0
      %694 = vmatpush1.msra.mxu0 %v680
      %695 = vmatprep.subr.mxu0 0.0
      %696 = vmatpush1.msra.mxu0 %v681
      %697 = vmatprep.subr.mxu0 0.0
      %698 = vmatpush1.msra.mxu0 %v682
      %699 = vmatprep.subr.mxu0 0.0
      %700 = vmatpush1.msra.mxu0 0.0
      %701 = vmatprep.subr.mxu0 0.0
      %702 = vmatpush1.msra.mxu0 0.0
      %703 = vmatprep.subr.mxu0 0.0
      %704 = vmatpush1.msra.mxu0 0.0
      %705 = vmatprep.subr.mxu0 0.0
      %706 = vmatpush1.msra.mxu0 0.0
      %707 = vmatprep.subr.mxu0 0.0
      %708 = vmatpush1.msra.mxu0 0.0
      %709 = vmatprep.subr.mxu0 0.0
      %710 = vmatpush1.msra.mxu0 0.0
      %711 = vmatprep.subr.mxu0 0.0
      %712 = vmatpush1.msra.mxu0 0.0
      %713 = vmatprep.subr.mxu0 0.0
      %714 = vmatpush1.msra.mxu0 0.0
      %715 = vmatprep.subr.mxu0 0.0
      %716 = vmatpush1.msra.mxu0 0.0
      %717 = vmatprep.subr.mxu0 0.0
      %718 = vmatpush1.msra.mxu0 0.0
      %719 = vmatprep.subr.mxu0 0.0
      %720 = vmatpush1.msra.mxu0 0.0
      %721 = vmatprep.subr.mxu0 0.0
      %722 = vmatpush1.msra.mxu0 0.0
      %723 = vmatprep.subr.mxu0 0.0
      %724 = vmatpush1.msra.mxu0 0.0
      %725 = vmatprep.subr.mxu0 0.0
      %726 = vmatpush1.msra.mxu0 0.0
      %727 = vmatprep.subr.mxu0 0.0
      %728 = vmatpush1.msra.mxu0 0.0
      %729 = vmatprep.subr.mxu0 0.0
      %730 = vmatpush1.msra.mxu0 0.0
      %731 = vmatprep.subr.mxu0 0.0
      %732 = vmatpush1.msra.mxu0 0.0
      %733 = vmatprep.subr.mxu0 0.0
      %734 = vmatpush1.msra.mxu0 0.0
      %735 = vmatprep.subr.mxu0 0.0
      %736 = vmatpush1.msra.mxu0 0.0
      %737 = vmatprep.subr.mxu0 0.0
      %738 = vmatpush1.msra.mxu0 0.0
      %739 = vmatprep.subr.mxu0 0.0
      %740 = vmatpush1.msra.mxu0 0.0
      %741 = vmatprep.subr.mxu0 0.0
      %742 = vmatpush1.msra.mxu0 0.0
      %743 = vmatprep.subr.mxu0 0.0
      %744 = vmatpush1.msra.mxu0 0.0
      %745 = vmatprep.subr.mxu0 0.0
      %746 = vmatpush1.msra.mxu0 0.0
      %747 = vmatprep.mubr.f32.mxu0 0.0
      %748 = vmatmul.mubr.f32.gmra.mrb[0].mxu0 %v386
      %v749 = vpop.f32.mrb[0].mxu0
      %v750 = vadd.f32 0.0, %v749
      %v751 = vpop.f32.mrb[0].mxu0
      %752 = vdwg.mxu0
      %v754 = vsel %vm384, %v664, 0
      %756 = vmatprep.subr.mxu0 0.0
      %757 = vmatpush1.msra.mxu0 %v667
      %758 = vmatprep.subr.mxu0 0.0
      %759 = vmatpush1.msra.mxu0 %v668
      %760 = vmatprep.subr.mxu0 0.0
      %761 = vmatpush1.msra.mxu0 %v669
      %762 = vmatprep.subr.mxu0 0.0
      %763 = vmatpush1.msra.mxu0 %v670
      %764 = vmatprep.subr.mxu0 0.0
      %765 = vmatpush1.msra.mxu0 %v671
      %766 = vmatprep.subr.mxu0 0.0
      %767 = vmatpush1.msra.mxu0 %v672
      %768 = vmatprep.subr.mxu0 0.0
      %769 = vmatpush1.msra.mxu0 %v673
      %770 = vmatprep.subr.mxu0 0.0
      %771 = vmatpush1.msra.mxu0 %v674
      %772 = vmatprep.subr.mxu0 0.0
      %773 = vmatpush1.msra.mxu0 0.0
      %774 = vmatprep.subr.mxu0 0.0
      %775 = vmatpush1.msra.mxu0 0.0
      %776 = vmatprep.subr.mxu0 0.0
      %777 = vmatpush1.msra.mxu0 0.0
      %778 = vmatprep.subr.mxu0 0.0
      %779 = vmatpush1.msra.mxu0 0.0
      %780 = vmatprep.subr.mxu0 0.0
      %781 = vmatpush1.msra.mxu0 0.0
      %782 = vmatprep.subr.mxu0 0.0
      %783 = vmatpush1.msra.mxu0 0.0
      %784 = vmatprep.subr.mxu0 0.0
      %785 = vmatpush1.msra.mxu0 0.0
      %786 = vmatprep.subr.mxu0 0.0
      %787 = vmatpush1.msra.mxu0 0.0
      %788 = vmatprep.subr.mxu0 0.0
      %789 = vmatpush1.msra.mxu0 0.0
      %790 = vmatprep.subr.mxu0 0.0
      %791 = vmatpush1.msra.mxu0 0.0
      %792 = vmatprep.subr.mxu0 0.0
      %793 = vmatpush1.msra.mxu0 0.0
      %794 = vmatprep.subr.mxu0 0.0
      %795 = vmatpush1.msra.mxu0 0.0
      %796 = vmatprep.subr.mxu0 0.0
      %797 = vmatpush1.msra.mxu0 0.0
      %798 = vmatprep.subr.mxu0 0.0
      %799 = vmatpush1.msra.mxu0 0.0
      %800 = vmatprep.subr.mxu0 0.0
      %801 = vmatpush1.msra.mxu0 0.0
      %802 = vmatprep.subr.mxu0 0.0
      %803 = vmatpush1.msra.mxu0 0.0
      %804 = vmatprep.subr.mxu0 0.0
      %805 = vmatpush1.msra.mxu0 0.0
      %806 = vmatprep.subr.mxu0 0.0
      %807 = vmatpush1.msra.mxu0 0.0
      %808 = vmatprep.subr.mxu0 0.0
      %809 = vmatpush1.msra.mxu0 0.0
      %810 = vmatprep.subr.mxu0 0.0
      %811 = vmatpush1.msra.mxu0 0.0
      %812 = vmatprep.subr.mxu0 0.0
      %813 = vmatpush1.msra.mxu0 0.0
      %814 = vmatprep.subr.mxu0 0.0
      %815 = vmatpush1.msra.mxu0 0.0
      %816 = vmatprep.subr.mxu0 0.0
      %817 = vmatpush1.msra.mxu0 0.0
      %818 = vmatprep.subr.mxu0 0.0
      %819 = vmatpush1.msra.mxu0 0.0
      %820 = vmatprep.mubr.f32.mxu0 0.0
      %821 = vmatmul.mubr.f32.gmra.mrb[0].mxu0 %v754
      %v822 = vpop.f32.mrb[0].mxu0
      %v823 = vadd.f32 %v750, %v822
      %v824 = vpop.f32.mrb[0].mxu0
      %825 = vdwg.mxu0
      %v826 = vtanh.pop %v823
      %827 = vst [vmem:[%s350] sm:$0xff] %v826
      %p828 = scmp.lt.s32.totalorder %s23, 1
      %s829 = scalar_select %p828, %s23, 1
      %p830 = scmp.lt.s32.totalorder %s24, 0
      %s831 = scalar_select %p830, %s24, 0
      %s832 = sadd.s32 %s831, %s829
      %s833 = smul.addr %s832, 8
      %s834 = scalar_lea.vmem %s6, %s833
      %p835 = scmp.lt.s32.totalorder %s23, 1
      %s836 = scalar_select %p835, %s23, 1
      %p837 = scmp.lt.s32.totalorder %s24, 0
      %s838 = scalar_select %p837, %s24, 0
      %s839 = sadd.s32 %s838, %s836
      %s840 = smul.addr %s839, 8
      %s841 = scalar_lea.vmem %s7, %s840
      // Predicated region
      $region45: #{soft_dot_attention.1} parent=43 // pred_check
        %p842 = pneg %p194
      $region46: #{soft_dot_attention.1} parent=43 // pred_check_branch
        %844 = sbr.rel (%p842) target = $region48
      $region47: #{soft_dot_attention.1} parent=43 // pred_region
        _
      $region48: #{soft_dot_attention.1} parent=43 // pred_fallthru
        _
      // Predicated region
      $region49: #{soft_dot_attention.1} parent=43 // pred_check
        %p845 = pneg %p222
      $region50: #{soft_dot_attention.1} parent=43 // pred_check_branch
        %847 = sbr.rel (%p845) target = $region52
      $region51: #{soft_dot_attention.1} parent=43 // pred_region
        _
      $region52: #{soft_dot_attention.1} parent=43 // pred_fallthru
        _
    $region44: #{soft_dot_attention.1} parent=5 // pred_fallthru
      _
    %p848 = scmp.le.s32.totalorder 2, %s14
    // Predicated region
    $region53: #{soft_dot_attention.1} parent=5 // pred_check
      %p849 = pneg %p848
    $region54: #{soft_dot_attention.1} parent=5 // pred_check_branch
      %851 = sbr.rel (%p849) target = $region56
    $region55: #{soft_dot_attention.1} parent=5 // pred_region
      %s852 = ssub.s32 %s14, 2
      // Predicated region
      $region57: #{soft_dot_attention.1} parent=55 // pred_check
        %p853 = pneg %p200
      $region58: #{soft_dot_attention.1} parent=55 // pred_check_branch
        %855 = sbr.rel (%p853) target = $region60
      $region59: #{soft_dot_attention.1} parent=55 // pred_region
        %p856 = scmp.lt.s32.totalorder %s25, 1
        %s857 = scalar_select %p856, %s25, 1
        %p858 = scmp.lt.s32.totalorder %s26, 0
        %s859 = scalar_select %p858, %s26, 0
        %s860 = sadd.s32 %s859, %s857
        %s861 = smul.addr %s860, 8
        %s862 = scalar_lea.vmem %s6, %s861
      $region60: #{soft_dot_attention.1} parent=55 // pred_fallthru
        _
      // Predicated region
      $region61: #{soft_dot_attention.1} parent=55 // pred_check
        %p863 = pneg %p228
      $region62: #{soft_dot_attention.1} parent=55 // pred_check_branch
        %865 = sbr.rel (%p863) target = $region64
      $region63: #{soft_dot_attention.1} parent=55 // pred_region
        %p866 = scmp.lt.s32.totalorder %s25, 1
        %s867 = scalar_select %p866, %s25, 1
        %p868 = scmp.lt.s32.totalorder %s26, 0
        %s869 = scalar_select %p868, %s26, 0
        %s870 = sadd.s32 %s869, %s867
        %s871 = smul.addr %s870, 8
        %s872 = scalar_lea.vmem %s7, %s871
      $region64: #{soft_dot_attention.1} parent=55 // pred_fallthru
        _
    $region56: #{soft_dot_attention.1} parent=5 // pred_fallthru
      _
  $region6: #{soft_dot_attention.1} parent=0 // loop_footer
    %s18 = sadd.s32 1, %s14
  $region7: #{soft_dot_attention.1} parent=0 // loop_footer_branch
    %13 = sbr.rel target = $region3
  $region8: #{soft_dot_attention.1} parent=0 // loop_exit
    _

</llo_original>
